<compile_context>
chip_gen: v6e
topology: v6e:2x2x1
jax: 0.10.0
libtpu: 0.0.40
codegen_flags: <defaults>
</compile_context>

<pallas_src>
import functools
import re
from typing import NamedTuple

import jax
import jax.numpy as jnp
from jax.experimental import pallas as pl
from jax.experimental.pallas import tpu as pltpu


def _round_up(n: int, m: int) -> int:
    return ((n + m - 1) // m) * m


def _cdiv(a: int, b: int) -> int:
    return (a + b - 1) // b


def _tpu_generation():
    try:
        dev = jax.devices()[0]
        if dev.platform != "tpu":
            return None
        m = re.search(r"(\d+)", dev.device_kind)
        return int(m.group(1)) if m else None
    except Exception:
        return None


_TPU_GEN = _tpu_generation()

# v6e/v7x MXU passes are 256 wide; v5e's are 128. Unknown -> 256 (denser, safe).
_LANE_ALIGN = 128 if (_TPU_GEN is not None and _TPU_GEN <= 5) else 256


def _vmem_capacity_bytes() -> int:
    try:
        return int(pltpu.get_tpu_info().vmem_capacity_bytes)
    except Exception:
        if _TPU_GEN is not None and _TPU_GEN >= 7:
            return 64 * 1024 * 1024     # v7x: 64 MiB per TensorCore
        if _TPU_GEN is not None:
            return 128 * 1024 * 1024    # v5e / v6e
        return 64 * 1024 * 1024         # unknown: be conservative


_VMEM_BUDGET = int(0.75 * _vmem_capacity_bytes())   # leave compiler headroom


# ----------------------------------------------------------------------------
# Kernels
# ----------------------------------------------------------------------------
def _aft_resident_kernel(x_ref, w1_ref, b1_ref, w2_ref, b2_ref, o_ref):
    """Both weight matrices fully resident in VMEM; one row tile per grid step."""
    x = x_ref[...].astype(w1_ref.dtype)            # in-kernel VPU cast (free filler)
    h = jnp.dot(x, w1_ref[...], preferred_element_type=jnp.float32)
    h = h + b1_ref[...]                            # f32 bias add
    y = jnp.dot(h.astype(w2_ref.dtype), w2_ref[...],
                preferred_element_type=jnp.float32)
    o_ref[...] = (y + b2_ref[...]).astype(o_ref.dtype)


def _aft_streamed_kernel(x_ref, w1_ref, b1_ref, w2_ref, b2_ref, o_ref, acc_ref):
    """Weights streamed in slabs of the intermediate feature dim (large F).

    grid = (row tiles, k slabs); k is the reduction axis (last, "arbitrary"):
      h_k  = X_tile @ W1[:, k-slab] + b1[k-slab]          -> (tm, tk)
      acc += h_k   @ W2[k-slab, :]                        -> (tm, Fp), f32 scratch
    """
    k = pl.program_id(1)

    @pl.when(k == 0)
    def _init():
        acc_ref[...] = jnp.zeros_like(acc_ref)

    x = x_ref[...].astype(w1_ref.dtype)
    h = jnp.dot(x, w1_ref[...], preferred_element_type=jnp.float32)
    h = h + b1_ref[...]
    acc_ref[...] += jnp.dot(h.astype(w2_ref.dtype), w2_ref[...],
                            preferred_element_type=jnp.float32)

    @pl.when(k == pl.num_programs(1) - 1)
    def _finalize():
        o_ref[...] = (acc_ref[...] + b2_ref[...]).astype(o_ref.dtype)


# ----------------------------------------------------------------------------
# Parameter preparation (pad + cast ONCE, off the per-call hot path)
# ----------------------------------------------------------------------------
class AFTParams(NamedTuple):
    w1: jax.Array      # (Fp, Fp) compute dtype, zero padded, (in, out) layout
    b1: jax.Array      # (1, Fp) float32
    w2: jax.Array      # (Fp, Fp) compute dtype
    b2: jax.Array      # (1, Fp) float32
    features: int      # original (unpadded) F


def prepare_aft_params(w1, b1, w2, b2, *, compute_dtype=jnp.bfloat16):
    """Pad F to the lane-align and cast to the MXU compute dtype, one time."""
    F = int(w1.shape[0])
    if (w1.shape != (F, F) or w2.shape != (F, F)
            or b1.shape != (F,) or b2.shape != (F,)):
        raise ValueError("AFT expects square (F, F) weights and (F,) biases")
    Fp = _round_up(max(F, 1), _LANE_ALIGN)
    cdt = jnp.dtype(compute_dtype)
    pad2 = ((0, Fp - F), (0, Fp - F))
    w1p = jnp.pad(w1.astype(cdt), pad2)
    w2p = jnp.pad(w2.astype(cdt), pad2)
    b1p = jnp.pad(b1.astype(jnp.float32), (0, Fp - F)).reshape(1, Fp)
    b2p = jnp.pad(b2.astype(jnp.float32), (0, Fp - F)).reshape(1, Fp)
    return AFTParams(w1p, b1p, w2p, b2p, F)


# ----------------------------------------------------------------------------
# Tile planning (generation- and VMEM-budget-aware)
# ----------------------------------------------------------------------------
def _row_granule(*dtypes) -> int:
    # Sublane packing: 8 rows for 32-bit, 16 for bf16, 32 for int8/fp8.
    g = 8
    for dt in dtypes:
        g = max(g, 8 * max(1, 4 // jnp.dtype(dt).itemsize))
    return g


def _pick_row_tile(M: int, max_tm: int, granule: int) -> int:
    tm = max(granule,
             min(_round_up(max_tm, granule), _round_up(max(M, 1), granule)))
    if _TPU_GEN is not None and _TPU_GEN >= 7:
        # Keep >= 2 row steps so ("parallel", ...) shards across both v7x cores.
        while tm > granule and _cdiv(M, tm) < 2:
            tm = max(granule, _round_up(tm // 2, granule))
    return tm


def _resident_plan(M, Fp, x_bytes, o_bytes, c_bytes, granule, max_tm):
    weight_bytes = 2 * 2 * Fp * Fp * c_bytes + 4 * Fp * 4   # W1,W2 (2 bufs) + biases

    def tile_bytes(t):
        # x/out double buffers + f32 intermediates (h, y, casts) headroom.
        return 2 * t * Fp * (x_bytes + o_bytes) + 4 * t * Fp * 4

    tm = _pick_row_tile(M, max_tm, granule)
    while tm > granule and weight_bytes + tile_bytes(tm) > _VMEM_BUDGET:
        tm = max(granule, _round_up(tm // 2, granule))   # shrink row tile first
    est = weight_bytes + tile_bytes(tm)
    return tm, est, est <= _VMEM_BUDGET


def _streamed_plan(M, Fp, x_bytes, o_bytes, c_bytes, granule, max_tm, max_tk):
    cap = max(128, min(Fp, max_tk))
    tk_candidates = [t for t in (1024, 512, 256, 128) if t <= cap and Fp % t == 0]
    if not tk_candidates:
        tk_candidates = [Fp]

    def tile_bytes(t_m, t_k):
        return (2 * t_m * Fp * x_bytes          # x row tile (double-buffered)
                + 4 * Fp * t_k * c_bytes        # W1 (Fp,tk) + W2 (tk,Fp), 2 bufs each
                + 2 * (t_k + Fp) * 4            # bias slabs
                + 2 * t_m * Fp * o_bytes        # out tile
                + t_m * Fp * 4                  # f32 accumulator scratch
                + 3 * t_m * t_k * 4)            # h / cast intermediates headroom

    tm0 = _pick_row_tile(M, max_tm, granule)
    for tk in tk_candidates:                    # biggest weight slab first
        tm = tm0
        while True:
            if tile_bytes(tm, tk) <= _VMEM_BUDGET:
                return tm, tk, tile_bytes(tm, tk)
            if tm <= granule:
                break
            tm = max(granule, _round_up(tm // 2, granule))
    tm, tk = granule, tk_candidates[-1]
    return tm, tk, tile_bytes(tm, tk)


# ----------------------------------------------------------------------------
# Forward
# ----------------------------------------------------------------------------
@functools.partial(
    jax.jit,
    static_argnames=("features", "out_dtype", "max_tm", "max_tk", "force_streamed"))
def _aft_forward_impl(x, w1p, b1p, w2p, b2p, *, features, out_dtype, max_tm,
                      max_tk, force_streamed):
    orig_shape = x.shape
    F = features
    Fp = w1p.shape[0]
    cdt = w1p.dtype
    odt = jnp.dtype(out_dtype) if out_dtype is not None else x.dtype

    x2d = x.reshape(-1, F)
    M = x2d.shape[0]

    x_bytes = jnp.dtype(x.dtype).itemsize
    o_bytes = jnp.dtype(odt).itemsize
    c_bytes = jnp.dtype(cdt).itemsize
    granule = _row_granule(x.dtype, odt)

    tm, est, resident_fits = _resident_plan(M, Fp, x_bytes, o_bytes, c_bytes,
                                            granule, max_tm)
    use_streamed = force_streamed or not resident_fits
    if use_streamed:
        tm, tk, est = _streamed_plan(M, Fp, x_bytes, o_bytes, c_bytes, granule,
                                     max_tm, max_tk)

    Mp = _round_up(max(M, 1), tm)
    # Zero-padding keeps the math exact: padded x columns hit zero weight rows,
    # padded intermediate columns are zero, padded output columns get sliced off.
    xp = jnp.pad(x2d, ((0, Mp - M), (0, Fp - F)))   # no cast here: cast in-kernel

    vmem_limit = int(min(_VMEM_BUDGET, max(32 * 1024 * 1024, int(1.25 * est))))
    cost = pl.CostEstimate(
        flops=4 * Mp * Fp * Fp,                     # two (Mp,Fp)@(Fp,Fp) matmuls
        transcendentals=0,
        bytes_accessed=int(Mp * Fp * (x_bytes + o_bytes)
                           + 2 * Fp * Fp * c_bytes + 2 * Fp * 4),
    )

    if not use_streamed:
        out = pl.pallas_call(
            _aft_resident_kernel,
            out_shape=jax.ShapeDtypeStruct((Mp, Fp), odt),
            grid_spec=pltpu.PrefetchScalarGridSpec(
                num_scalar_prefetch=0,
                grid=(Mp // tm,),
                in_specs=[
                    pl.BlockSpec((tm, Fp), lambda i: (i, 0)),   # x row tile
                    pl.BlockSpec((Fp, Fp), lambda i: (0, 0)),   # W1 (resident)
                    pl.BlockSpec((1, Fp), lambda i: (0, 0)),    # b1
                    pl.BlockSpec((Fp, Fp), lambda i: (0, 0)),   # W2 (resident)
                    pl.BlockSpec((1, Fp), lambda i: (0, 0)),    # b2
                ],
                out_specs=pl.BlockSpec((tm, Fp), lambda i: (i, 0)),
            ),
            compiler_params=pltpu.CompilerParams(
                dimension_semantics=("parallel",),
                vmem_limit_bytes=vmem_limit,
            ),
            cost_estimate=cost,
        )(xp, w1p, b1p, w2p, b2p)
    else:
        out = pl.pallas_call(
            _aft_streamed_kernel,
            out_shape=jax.ShapeDtypeStruct((Mp, Fp), odt),
            grid_spec=pltpu.PrefetchScalarGridSpec(
                num_scalar_prefetch=0,
                grid=(Mp // tm, Fp // tk),
                in_specs=[
                    pl.BlockSpec((tm, Fp), lambda i, k: (i, 0)),  # x row tile
                    pl.BlockSpec((Fp, tk), lambda i, k: (0, k)),  # W1 column slab
                    pl.BlockSpec((1, tk), lambda i, k: (0, k)),   # b1 slab
                    pl.BlockSpec((tk, Fp), lambda i, k: (k, 0)),  # W2 row slab
                    pl.BlockSpec((1, Fp), lambda i, k: (0, 0)),   # b2
                ],
                out_specs=pl.BlockSpec((tm, Fp), lambda i, k: (i, 0)),
                scratch_shapes=[pltpu.VMEM((tm, Fp), jnp.float32)],
            ),
            compiler_params=pltpu.CompilerParams(
                dimension_semantics=("parallel", "arbitrary"),
                vmem_limit_bytes=vmem_limit,
            ),
            cost_estimate=cost,
        )(xp, w1p, b1p, w2p, b2p)

    return out[:M, :F].reshape(orig_shape)


def aft_forward(x, params: AFTParams, *, out_dtype=None, max_tm=256,
                max_tk=512, force_streamed=False):
    """AFT forward: y = (x @ W1 + b1) @ W2 + b2.  x: (..., F)."""
    if x.shape[-1] != params.features:
        raise ValueError(
            f"last dim of x ({x.shape[-1]}) != features ({params.features})")
    odt = None if out_dtype is None else jnp.dtype(out_dtype).name
    return _aft_forward_impl(
        x, params.w1, params.b1, params.w2, params.b2,
        features=params.features, out_dtype=odt,
        max_tm=int(max_tm), max_tk=int(max_tk),
        force_streamed=bool(force_streamed))


def init_aft_params(key, features, dtype=jnp.float32):
    """Deterministic init mimicking nn.Linear default (uniform +/- 1/sqrt(fan_in))."""
    k1, k2, k3, k4 = jax.random.split(key, 4)
    bound = 1.0 / (features ** 0.5)
    # Stored directly in (in_features, out_features) layout used by the kernel.
    w1 = jax.random.uniform(k1, (features, features), dtype, -bound, bound)
    b1 = jax.random.uniform(k2, (features,), dtype, -bound, bound)
    w2 = jax.random.uniform(k3, (features, features), dtype, -bound, bound)
    b2 = jax.random.uniform(k4, (features,), dtype, -bound, bound)
    return w1, b1, w2, b2


if __name__ == "__main__":
    key = jax.random.PRNGKey(0)
    k_x, k_p = jax.random.split(key)

    batch, seq, features = 2, 8, 32
    x = jax.random.normal(k_x, (batch, seq, features), jnp.float32)
    w1, b1, w2, b2 = init_aft_params(k_p, features)

    # Pure-JAX reference of AFT.forward: Linear(F,F) -> Linear(F,F)
    ref = (x @ w1 + b1) @ w2 + b2

    # Default path: bf16 MXU operands, f32 accumulation (review's main lever).
    params_bf16 = prepare_aft_params(w1, b1, w2, b2)
    y_bf16 = jax.block_until_ready(aft_forward(x, params_bf16))
    assert y_bf16.shape == x.shape and y_bf16.dtype == x.dtype
    assert jnp.allclose(y_bf16, ref, atol=1e-1, rtol=5e-2), "bf16 mismatch vs reference"

    # Exact f32 compute path (resident-weight kernel).
    params_f32 = prepare_aft_params(w1, b1, w2, b2, compute_dtype=jnp.float32)
    y_f32 = jax.block_until_ready(aft_forward(x, params_f32))
    assert y_f32.shape == x.shape
    assert jnp.allclose(y_f32, ref, atol=1e-5, rtol=1e-5), "f32 mismatch vs reference"

    # Streamed-weight (K-tiled) kernel, forced at small shapes to exercise the
    # large-F path: f32 accumulator scratch, pl.when init/finalize, k "arbitrary".
    y_str = jax.block_until_ready(
        aft_forward(x, params_f32, force_streamed=True, max_tk=128))
    assert jnp.allclose(y_str, ref, atol=1e-5, rtol=1e-5), "streamed mismatch vs reference"

    print("KERNEL_OK")
</pallas_src>

<mosaic_0001>
module attributes {stable_mosaic.version = 11 : i64} {
  func.func @_aft_resident_kernel(%arg0: i32, %arg1: memref<16x256xf32, #tpu.memory_space<vmem>>, %arg2: memref<256x256xbf16, #tpu.memory_space<vmem>>, %arg3: memref<1x256xf32, #tpu.memory_space<vmem>>, %arg4: memref<256x256xbf16, #tpu.memory_space<vmem>>, %arg5: memref<1x256xf32, #tpu.memory_space<vmem>>, %arg6: memref<16x256xf32, #tpu.memory_space<vmem>>) attributes {dimension_semantics = [#tpu.dimension_semantics<parallel>], iteration_bounds = array<i64: 1>, scalar_prefetch = 0 : i64, scratch_operands = 0 : i64, tpu.core_type = #tpu.core_type<tc>, window_params = [{transform_indices = @transform_0, window_bounds = array<i64: 16, 256>}, {pipeline_mode = #tpu.pipeline_mode<synchronous>, transform_indices = @transform_1, window_bounds = array<i64: 256, 256>}, {pipeline_mode = #tpu.pipeline_mode<synchronous>, transform_indices = @transform_2, window_bounds = array<i64: 1, 256>}, {pipeline_mode = #tpu.pipeline_mode<synchronous>, transform_indices = @transform_3, window_bounds = array<i64: 256, 256>}, {pipeline_mode = #tpu.pipeline_mode<synchronous>, transform_indices = @transform_4, window_bounds = array<i64: 1, 256>}, {transform_indices = @transform_5, window_bounds = array<i64: 16, 256>}]} {
    %c0 = arith.constant 0 : index
    %c0_0 = arith.constant 0 : index
    %0 = vector.load %arg1[%c0, %c0_0] : memref<16x256xf32, #tpu.memory_space<vmem>>, vector<16x256xf32>
    %1 = arith.truncf %0 : vector<16x256xf32> to vector<16x256xbf16>
    %c0_1 = arith.constant 0 : index
    %c0_2 = arith.constant 0 : index
    %2 = vector.load %arg2[%c0_1, %c0_2] : memref<256x256xbf16, #tpu.memory_space<vmem>>, vector<256x256xbf16>
    %cst = arith.constant dense<0.000000e+00> : vector<16x256xf32>
    %3 = tpu.matmul %1, %2, %cst {dimension_numbers = #tpu.dot_dimension_numbers<[1], [0], [0], [1], [0, 0, 1, 1], [], []>} : vector<16x256xbf16>, vector<256x256xbf16>, vector<16x256xf32> -> vector<16x256xf32>
    %c0_3 = arith.constant 0 : index
    %c0_4 = arith.constant 0 : index
    %4 = vector.load %arg3[%c0_3, %c0_4] : memref<1x256xf32, #tpu.memory_space<vmem>>, vector<1x256xf32>
    %5 = vector.broadcast %4 : vector<1x256xf32> to vector<16x256xf32>
    %6 = arith.addf %3, %5 : vector<16x256xf32>
    %7 = arith.truncf %6 : vector<16x256xf32> to vector<16x256xbf16>
    %c0_5 = arith.constant 0 : index
    %c0_6 = arith.constant 0 : index
    %8 = vector.load %arg4[%c0_5, %c0_6] : memref<256x256xbf16, #tpu.memory_space<vmem>>, vector<256x256xbf16>
    %cst_7 = arith.constant dense<0.000000e+00> : vector<16x256xf32>
    %9 = tpu.matmul %7, %8, %cst_7 {dimension_numbers = #tpu.dot_dimension_numbers<[1], [0], [0], [1], [0, 0, 1, 1], [], []>} : vector<16x256xbf16>, vector<256x256xbf16>, vector<16x256xf32> -> vector<16x256xf32>
    %c0_8 = arith.constant 0 : index
    %c0_9 = arith.constant 0 : index
    %10 = vector.load %arg5[%c0_8, %c0_9] : memref<1x256xf32, #tpu.memory_space<vmem>>, vector<1x256xf32>
    %11 = vector.broadcast %10 : vector<1x256xf32> to vector<16x256xf32>
    %12 = arith.addf %9, %11 : vector<16x256xf32>
    %c0_10 = arith.constant 0 : index
    %c0_11 = arith.constant 0 : index
    %13 = vector.load %arg6[%c0_10, %c0_11] : memref<16x256xf32, #tpu.memory_space<vmem>>, vector<16x256xf32>
    tpu.vector_store %arg6[%c0_10, %c0_11], %12 {strides = array<i32>} : memref<16x256xf32, #tpu.memory_space<vmem>>, vector<16x256xf32>,
    return
  }
  func.func @transform_0(%arg0: i32) -> (i32, i32) {
    %c0_i32 = arith.constant 0 : i32
    %c0_i32_0 = arith.constant 0 : i32
    return %arg0, %c0_i32 : i32, i32
  }
  func.func @transform_1(%arg0: i32) -> (i32, i32) {
    %c0_i32 = arith.constant 0 : i32
    %c0_i32_0 = arith.constant 0 : i32
    %c0_i32_1 = arith.constant 0 : i32
    return %c0_i32, %c0_i32_0 : i32, i32
  }
  func.func @transform_2(%arg0: i32) -> (i32, i32) {
    %c0_i32 = arith.constant 0 : i32
    %c0_i32_0 = arith.constant 0 : i32
    %c0_i32_1 = arith.constant 0 : i32
    return %c0_i32, %c0_i32_0 : i32, i32
  }
  func.func @transform_3(%arg0: i32) -> (i32, i32) {
    %c0_i32 = arith.constant 0 : i32
    %c0_i32_0 = arith.constant 0 : i32
    %c0_i32_1 = arith.constant 0 : i32
    return %c0_i32, %c0_i32_0 : i32, i32
  }
  func.func @transform_4(%arg0: i32) -> (i32, i32) {
    %c0_i32 = arith.constant 0 : i32
    %c0_i32_0 = arith.constant 0 : i32
    %c0_i32_1 = arith.constant 0 : i32
    return %c0_i32, %c0_i32_0 : i32, i32
  }
  func.func @transform_5(%arg0: i32) -> (i32, i32) {
    %c0_i32 = arith.constant 0 : i32
    %c0_i32_0 = arith.constant 0 : i32
    return %arg0, %c0_i32 : i32, i32
  }
}

</mosaic_0001>

<llo_original>
// kernel: _aft_forward_impl.1
$region0: #{_aft_forward_impl.1}
  #allocation0 [shape = 'u32[]', space=smem, size = 0x4, offset = 0x4, fixed_abs, tag = 'smem constant byte address 0x4 - core index']
  #allocation1 [shape = 'u32[144,128]{1,0:T(1,128)}', space=vmem, size = 0x12000, scoped, tag = 'internal scratch']
  %s0 = inlined_call_operand.vmem [shape: f32[16,256], index: 0, kind: input, shape index: {}]
  %s1 = inlined_call_operand.hbm [shape: bf16[256,256], index: 1, kind: input, shape index: {}]
  %s2 = inlined_call_operand.vmem [shape: f32[1,256], index: 2, kind: input, shape index: {}]
  %s3 = inlined_call_operand.hbm [shape: bf16[256,256], index: 3, kind: input, shape index: {}]
  %s4 = inlined_call_operand.vmem [shape: f32[1,256], index: 4, kind: input, shape index: {}]
  %s5 = inlined_call_operand.vmem [shape: f32[16,256], index: 5, kind: output, shape index: {}]
  %s6 = sld [smem:[#allocation0]]
  $region38: #{_aft_forward_impl.1} parent=0
    _
  %s8 = ssub.s32 1, %s6
  %s9 = scalar_select 0, %s8, %s6
  $region1: #{_aft_forward_impl.1} parent=0
    #allocation2 [shape = 'u8[131072]{0}', space=vmem, size = 0x20000, scoped, tag = 'input window, operand 1, single buffered']
    #allocation3 [shape = 's32[1]{0}', space=sflag, size = 0x4, scoped, tag = 'scoped memory for _aft_forward_impl.1']
    #allocation4 [shape = 'u8[131072]{0}', space=vmem, size = 0x20000, scoped, tag = 'input window, operand 3, single buffered']
    #allocation5 [shape = 's32[1]{0}', space=sflag, size = 0x4, scoped, tag = 'scoped memory for _aft_forward_impl.1']
    %10 = vsyncpa [#allocation3], 0
    %11 = vsyncpa [#allocation5], 0
    // Predicated region
    $region2: #{_aft_forward_impl.1} parent=1 // pred_check
      _
    $region3: #{_aft_forward_impl.1} parent=1 // pred_check_branch
      %13 = sbr.rel (0) target = $region5
    $region4: #{_aft_forward_impl.1} parent=1 // pred_region
      _
    $region5: #{_aft_forward_impl.1} parent=1 // pred_fallthru
      _
    // Predicated region
    $region6: #{_aft_forward_impl.1} parent=1 // pred_check
      _
    $region7: #{_aft_forward_impl.1} parent=1 // pred_check_branch
      %15 = sbr.rel (0) target = $region9
    $region8: #{_aft_forward_impl.1} parent=1 // pred_region
      %s17 = ssub.s32 4096, 4096
      %18 = vsyncadd [#allocation3], %s17
      %s19 = sshll.u32 [#allocation2], 4
      %s20 = int_to_ptr.vmem [resolvable:$true] %s19
      %25 = dma.hbm_to_vmem [thread:$0]  %s1, 4096, %s20, [#allocation3], 128, 128, 8
    $region9: #{_aft_forward_impl.1} parent=1 // pred_fallthru
      _
    // Predicated region
    $region10: #{_aft_forward_impl.1} parent=1 // pred_check
      _
    $region11: #{_aft_forward_impl.1} parent=1 // pred_check_branch
      %27 = sbr.rel (0) target = $region13
    $region12: #{_aft_forward_impl.1} parent=1 // pred_region
      _
    $region13: #{_aft_forward_impl.1} parent=1 // pred_fallthru
      _
    // Predicated region
    $region14: #{_aft_forward_impl.1} parent=1 // pred_check
      _
    $region15: #{_aft_forward_impl.1} parent=1 // pred_check_branch
      %29 = sbr.rel (0) target = $region17
    $region16: #{_aft_forward_impl.1} parent=1 // pred_region
      %s31 = ssub.s32 4096, 4096
      %32 = vsyncadd [#allocation5], %s31
      %s33 = sshll.u32 [#allocation4], 4
      %s34 = int_to_ptr.vmem [resolvable:$true] %s33
      %39 = dma.hbm_to_vmem [thread:$0]  %s3, 4096, %s34, [#allocation5], 128, 128, 8
    $region17: #{_aft_forward_impl.1} parent=1 // pred_fallthru
      _
    // Predicated region
    $region18: #{_aft_forward_impl.1} parent=1 // pred_check
      _
    $region19: #{_aft_forward_impl.1} parent=1 // pred_check_branch
      %41 = sbr.rel (0) target = $region21
    $region20: #{_aft_forward_impl.1} parent=1 // pred_region
      _
    $region21: #{_aft_forward_impl.1} parent=1 // pred_fallthru
      _
    // Predicated region
    $region22: #{_aft_forward_impl.1} parent=1 // pred_check
      _
    $region23: #{_aft_forward_impl.1} parent=1 // pred_check_branch
      %43 = sbr.rel (0) target = $region25
    $region24: #{_aft_forward_impl.1} parent=1 // pred_region
      %44 = dma.done [#allocation3], 4096
    $region25: #{_aft_forward_impl.1} parent=1 // pred_fallthru
      _
    // Predicated region
    $region26: #{_aft_forward_impl.1} parent=1 // pred_check
      _
    $region27: #{_aft_forward_impl.1} parent=1 // pred_check_branch
      %46 = sbr.rel (0) target = $region29
    $region28: #{_aft_forward_impl.1} parent=1 // pred_region
      %47 = dma.done [#allocation5], 4096
    $region29: #{_aft_forward_impl.1} parent=1 // pred_fallthru
      _
    %v48 = vld [vmem:[%s0] sm:$0xff]
    %v49 = vld [vmem:[%s0 + $0x8] sm:$0xff]
    %v50 = vld [vmem:[%s0 + $0x10] sm:$0xff]
    %v51 = vld [vmem:[%s0 + $0x18] sm:$0xff]
    %v52 = vpack.c.bf16 %v50, %v48
    %v53 = vpack.c.bf16 %v51, %v49
    %v54 = vld [vmem:[#allocation2] sm:$0xff]
    %v55 = vld [vmem:[#allocation2 + $0x8] sm:$0xff]
    %v56 = vld [vmem:[#allocation2 + $0x10] sm:$0xff]
    %v57 = vld [vmem:[#allocation2 + $0x18] sm:$0xff]
    %v58 = vld [vmem:[#allocation2 + $0x20] sm:$0xff]
    %v59 = vld [vmem:[#allocation2 + $0x28] sm:$0xff]
    %v60 = vld [vmem:[#allocation2 + $0x30] sm:$0xff]
    %v61 = vld [vmem:[#allocation2 + $0x38] sm:$0xff]
    %v62 = vld [vmem:[#allocation2 + $0x40] sm:$0xff]
    %v63 = vld [vmem:[#allocation2 + $0x48] sm:$0xff]
    %v64 = vld [vmem:[#allocation2 + $0x50] sm:$0xff]
    %v65 = vld [vmem:[#allocation2 + $0x58] sm:$0xff]
    %v66 = vld [vmem:[#allocation2 + $0x60] sm:$0xff]
    %v67 = vld [vmem:[#allocation2 + $0x68] sm:$0xff]
    %v68 = vld [vmem:[#allocation2 + $0x70] sm:$0xff]
    %v69 = vld [vmem:[#allocation2 + $0x78] sm:$0xff]
    %v70 = vld [vmem:[#allocation2 + $0x80] sm:$0xff]
    %v71 = vld [vmem:[#allocation2 + $0x88] sm:$0xff]
    %v72 = vld [vmem:[#allocation2 + $0x90] sm:$0xff]
    %v73 = vld [vmem:[#allocation2 + $0x98] sm:$0xff]
    %v74 = vld [vmem:[#allocation2 + $0xa0] sm:$0xff]
    %v75 = vld [vmem:[#allocation2 + $0xa8] sm:$0xff]
    %v76 = vld [vmem:[#allocation2 + $0xb0] sm:$0xff]
    %v77 = vld [vmem:[#allocation2 + $0xb8] sm:$0xff]
    %v78 = vld [vmem:[#allocation2 + $0xc0] sm:$0xff]
    %v79 = vld [vmem:[#allocation2 + $0xc8] sm:$0xff]
    %v80 = vld [vmem:[#allocation2 + $0xd0] sm:$0xff]
    %v81 = vld [vmem:[#allocation2 + $0xd8] sm:$0xff]
    %v82 = vld [vmem:[#allocation2 + $0xe0] sm:$0xff]
    %v83 = vld [vmem:[#allocation2 + $0xe8] sm:$0xff]
    %v84 = vld [vmem:[#allocation2 + $0xf0] sm:$0xff]
    %v85 = vld [vmem:[#allocation2 + $0xf8] sm:$0xff]
    %v86 = vld [vmem:[%s2] sm:$0x3]
    %v88 = vlaneseq
    %v89 = vshrl.u32 %v88, 7
    %v90 = vsub.s32 0, %v89
    %v91 = vrot.slane %v86, %v90
    %v92 = vlaneseq
    %v93 = vshrl.u32 %v92, 7
    %v94 = vsub.s32 1, %v93
    %v95 = vrot.slane %v86, %v94
    %v130 = vunpack.c.l.b16 %v54
    %v131 = vunpack.c.h.b16 %v54
    %v132 = vunpack.c.l.b16 %v55
    %v133 = vunpack.c.h.b16 %v55
    %v134 = vunpack.c.l.b16 %v56
    %v135 = vunpack.c.h.b16 %v56
    %v136 = vunpack.c.l.b16 %v57
    %v137 = vunpack.c.h.b16 %v57
    %v138 = vunpack.c.l.b16 %v58
    %v139 = vunpack.c.h.b16 %v58
    %v140 = vunpack.c.l.b16 %v59
    %v141 = vunpack.c.h.b16 %v59
    %v142 = vunpack.c.l.b16 %v60
    %v143 = vunpack.c.h.b16 %v60
    %v144 = vunpack.c.l.b16 %v61
    %v145 = vunpack.c.h.b16 %v61
    %v146 = vunpack.c.l.b16 %v62
    %v147 = vunpack.c.h.b16 %v62
    %v148 = vunpack.c.l.b16 %v63
    %v149 = vunpack.c.h.b16 %v63
    %v150 = vunpack.c.l.b16 %v64
    %v151 = vunpack.c.h.b16 %v64
    %v152 = vunpack.c.l.b16 %v65
    %v153 = vunpack.c.h.b16 %v65
    %v154 = vunpack.c.l.b16 %v66
    %v155 = vunpack.c.h.b16 %v66
    %v156 = vunpack.c.l.b16 %v67
    %v157 = vunpack.c.h.b16 %v67
    %v158 = vunpack.c.l.b16 %v68
    %v159 = vunpack.c.h.b16 %v68
    %v160 = vunpack.c.l.b16 %v69
    %v161 = vunpack.c.h.b16 %v69
    %v162 = vunpack.c.l.b16 %v70
    %v163 = vunpack.c.h.b16 %v70
    %v164 = vunpack.c.l.b16 %v71
    %v165 = vunpack.c.h.b16 %v71
    %v166 = vunpack.c.l.b16 %v72
    %v167 = vunpack.c.h.b16 %v72
    %v168 = vunpack.c.l.b16 %v73
    %v169 = vunpack.c.h.b16 %v73
    %v170 = vunpack.c.l.b16 %v74
    %v171 = vunpack.c.h.b16 %v74
    %v172 = vunpack.c.l.b16 %v75
    %v173 = vunpack.c.h.b16 %v75
    %v174 = vunpack.c.l.b16 %v76
    %v175 = vunpack.c.h.b16 %v76
    %v176 = vunpack.c.l.b16 %v77
    %v177 = vunpack.c.h.b16 %v77
    %v178 = vunpack.c.l.b16 %v78
    %v179 = vunpack.c.h.b16 %v78
    %v180 = vunpack.c.l.b16 %v79
    %v181 = vunpack.c.h.b16 %v79
    %v182 = vunpack.c.l.b16 %v80
    %v183 = vunpack.c.h.b16 %v80
    %v184 = vunpack.c.l.b16 %v81
    %v185 = vunpack.c.h.b16 %v81
    %v186 = vunpack.c.l.b16 %v82
    %v187 = vunpack.c.h.b16 %v82
    %v188 = vunpack.c.l.b16 %v83
    %v189 = vunpack.c.h.b16 %v83
    %v190 = vunpack.c.l.b16 %v84
    %v191 = vunpack.c.h.b16 %v84
    %v192 = vunpack.c.l.b16 %v85
    %v193 = vunpack.c.h.b16 %v85
    %v194 = vpack.c.b16 %v132, %v130
    %v195 = vpack.c.b16 %v133, %v131
    %v196 = vpack.c.b16 %v136, %v134
    %v197 = vpack.c.b16 %v137, %v135
    %v198 = vpack.c.b16 %v140, %v138
    %v199 = vpack.c.b16 %v141, %v139
    %v200 = vpack.c.b16 %v144, %v142
    %v201 = vpack.c.b16 %v145, %v143
    %v202 = vpack.c.b16 %v148, %v146
    %v203 = vpack.c.b16 %v149, %v147
    %v204 = vpack.c.b16 %v152, %v150
    %v205 = vpack.c.b16 %v153, %v151
    %v206 = vpack.c.b16 %v156, %v154
    %v207 = vpack.c.b16 %v157, %v155
    %v208 = vpack.c.b16 %v160, %v158
    %v209 = vpack.c.b16 %v161, %v159
    %v210 = vpack.c.b16 %v164, %v162
    %v211 = vpack.c.b16 %v165, %v163
    %v212 = vpack.c.b16 %v168, %v166
    %v213 = vpack.c.b16 %v169, %v167
    %v214 = vpack.c.b16 %v172, %v170
    %v215 = vpack.c.b16 %v173, %v171
    %v216 = vpack.c.b16 %v176, %v174
    %v217 = vpack.c.b16 %v177, %v175
    %v218 = vpack.c.b16 %v180, %v178
    %v219 = vpack.c.b16 %v181, %v179
    %v220 = vpack.c.b16 %v184, %v182
    %v221 = vpack.c.b16 %v185, %v183
    %v222 = vpack.c.b16 %v188, %v186
    %v223 = vpack.c.b16 %v189, %v187
    %v224 = vpack.c.b16 %v192, %v190
    %v225 = vpack.c.b16 %v193, %v191
    %258 = vmatprep.subr.bf16.mxu0 %v209
    %259 = vmatpush1.bf16.msra.mxu0 %v208
    %260 = vmatprep.subr.bf16.mxu0 %v207
    %261 = vmatpush1.bf16.msra.mxu0 %v206
    %262 = vmatprep.subr.bf16.mxu0 %v205
    %263 = vmatpush1.bf16.msra.mxu0 %v204
    %264 = vmatprep.subr.bf16.mxu0 %v203
    %265 = vmatpush1.bf16.msra.mxu0 %v202
    %266 = vmatprep.subr.bf16.mxu0 %v201
    %267 = vmatpush1.bf16.msra.mxu0 %v200
    %268 = vmatprep.subr.bf16.mxu0 %v199
    %269 = vmatpush1.bf16.msra.mxu0 %v198
    %270 = vmatprep.subr.bf16.mxu0 %v197
    %271 = vmatpush1.bf16.msra.mxu0 %v196
    %272 = vmatprep.subr.bf16.mxu0 %v195
    %273 = vmatpush1.bf16.msra.mxu0 %v194
    %274 = vmatprep.subr.bf16.mxu0 %v225
    %275 = vmatpush2.bf16.msra.mxu0 %v224
    %276 = vmatprep.subr.bf16.mxu0 %v223
    %277 = vmatpush2.bf16.msra.mxu0 %v222
    %278 = vmatprep.subr.bf16.mxu0 %v221
    %279 = vmatpush2.bf16.msra.mxu0 %v220
    %280 = vmatprep.subr.bf16.mxu0 %v219
    %281 = vmatpush2.bf16.msra.mxu0 %v218
    %282 = vmatprep.subr.bf16.mxu0 %v217
    %283 = vmatpush2.bf16.msra.mxu0 %v216
    %284 = vmatprep.subr.bf16.mxu0 %v215
    %285 = vmatpush2.bf16.msra.mxu0 %v214
    %286 = vmatprep.subr.bf16.mxu0 %v213
    %287 = vmatpush2.bf16.msra.mxu0 %v212
    %288 = vmatprep.subr.bf16.mxu0 %v211
    %289 = vmatpush2.bf16.msra.mxu0 %v210
    %290 = vmatprep.mubr.bf16.mxu0 %v53
    %291 = vmatmul.mubr.bf16.gmra.mxu0 %v52
    %v292 = vpop.f32.mrf.mxu0
    %v293 = vadd.f32 %v91, %v292
    %v294 = vpop.f32.mrf.mxu0
    %v295 = vadd.f32 %v95, %v294
    %v296 = vpop.f32.mrf.mxu0
    %v297 = vadd.f32 %v91, %v296
    %v298 = vpop.f32.mrf.mxu0
    %v299 = vadd.f32 %v95, %v298
    %300 = vdwg.mxu0
    %v301 = vpack.c.bf16 %v297, %v293
    %v302 = vpack.c.bf16 %v299, %v295
    %v303 = vld [vmem:[#allocation4] sm:$0xff]
    %v304 = vld [vmem:[#allocation4 + $0x8] sm:$0xff]
    %v305 = vld [vmem:[#allocation4 + $0x10] sm:$0xff]
    %v306 = vld [vmem:[#allocation4 + $0x18] sm:$0xff]
    %v307 = vld [vmem:[#allocation4 + $0x20] sm:$0xff]
    %v308 = vld [vmem:[#allocation4 + $0x28] sm:$0xff]
    %v309 = vld [vmem:[#allocation4 + $0x30] sm:$0xff]
    %v310 = vld [vmem:[#allocation4 + $0x38] sm:$0xff]
    %v311 = vld [vmem:[#allocation4 + $0x40] sm:$0xff]
    %v312 = vld [vmem:[#allocation4 + $0x48] sm:$0xff]
    %v313 = vld [vmem:[#allocation4 + $0x50] sm:$0xff]
    %v314 = vld [vmem:[#allocation4 + $0x58] sm:$0xff]
    %v315 = vld [vmem:[#allocation4 + $0x60] sm:$0xff]
    %v316 = vld [vmem:[#allocation4 + $0x68] sm:$0xff]
    %v317 = vld [vmem:[#allocation4 + $0x70] sm:$0xff]
    %v318 = vld [vmem:[#allocation4 + $0x78] sm:$0xff]
    %v319 = vld [vmem:[#allocation4 + $0x80] sm:$0xff]
    %v320 = vld [vmem:[#allocation4 + $0x88] sm:$0xff]
    %v321 = vld [vmem:[#allocation4 + $0x90] sm:$0xff]
    %v322 = vld [vmem:[#allocation4 + $0x98] sm:$0xff]
    %v323 = vld [vmem:[#allocation4 + $0xa0] sm:$0xff]
    %v324 = vld [vmem:[#allocation4 + $0xa8] sm:$0xff]
    %v325 = vld [vmem:[#allocation4 + $0xb0] sm:$0xff]
    %v326 = vld [vmem:[#allocation4 + $0xb8] sm:$0xff]
    %v327 = vld [vmem:[#allocation4 + $0xc0] sm:$0xff]
    %v328 = vld [vmem:[#allocation4 + $0xc8] sm:$0xff]
    %v329 = vld [vmem:[#allocation4 + $0xd0] sm:$0xff]
    %v330 = vld [vmem:[#allocation4 + $0xd8] sm:$0xff]
    %v331 = vld [vmem:[#allocation4 + $0xe0] sm:$0xff]
    %v332 = vld [vmem:[#allocation4 + $0xe8] sm:$0xff]
    %v333 = vld [vmem:[#allocation4 + $0xf0] sm:$0xff]
    %v334 = vld [vmem:[#allocation4 + $0xf8] sm:$0xff]
    %v335 = vld [vmem:[%s4] sm:$0x3]
    %v337 = vlaneseq
    %v338 = vshrl.u32 %v337, 7
    %v339 = vsub.s32 0, %v338
    %v340 = vrot.slane %v335, %v339
    %v341 = vlaneseq
    %v342 = vshrl.u32 %v341, 7
    %v343 = vsub.s32 1, %v342
    %v344 = vrot.slane %v335, %v343
    %v379 = vunpack.c.l.b16 %v303
    %v380 = vunpack.c.h.b16 %v303
    %v381 = vunpack.c.l.b16 %v304
    %v382 = vunpack.c.h.b16 %v304
    %v383 = vunpack.c.l.b16 %v305
    %v384 = vunpack.c.h.b16 %v305
    %v385 = vunpack.c.l.b16 %v306
    %v386 = vunpack.c.h.b16 %v306
    %v387 = vunpack.c.l.b16 %v307
    %v388 = vunpack.c.h.b16 %v307
    %v389 = vunpack.c.l.b16 %v308
    %v390 = vunpack.c.h.b16 %v308
    %v391 = vunpack.c.l.b16 %v309
    %v392 = vunpack.c.h.b16 %v309
    %v393 = vunpack.c.l.b16 %v310
    %v394 = vunpack.c.h.b16 %v310
    %v395 = vunpack.c.l.b16 %v311
    %v396 = vunpack.c.h.b16 %v311
    %v397 = vunpack.c.l.b16 %v312
    %v398 = vunpack.c.h.b16 %v312
    %v399 = vunpack.c.l.b16 %v313
    %v400 = vunpack.c.h.b16 %v313
    %v401 = vunpack.c.l.b16 %v314
    %v402 = vunpack.c.h.b16 %v314
    %v403 = vunpack.c.l.b16 %v315
    %v404 = vunpack.c.h.b16 %v315
    %v405 = vunpack.c.l.b16 %v316
    %v406 = vunpack.c.h.b16 %v316
    %v407 = vunpack.c.l.b16 %v317
    %v408 = vunpack.c.h.b16 %v317
    %v409 = vunpack.c.l.b16 %v318
    %v410 = vunpack.c.h.b16 %v318
    %v411 = vunpack.c.l.b16 %v319
    %v412 = vunpack.c.h.b16 %v319
    %v413 = vunpack.c.l.b16 %v320
    %v414 = vunpack.c.h.b16 %v320
    %v415 = vunpack.c.l.b16 %v321
    %v416 = vunpack.c.h.b16 %v321
    %v417 = vunpack.c.l.b16 %v322
    %v418 = vunpack.c.h.b16 %v322
    %v419 = vunpack.c.l.b16 %v323
    %v420 = vunpack.c.h.b16 %v323
    %v421 = vunpack.c.l.b16 %v324
    %v422 = vunpack.c.h.b16 %v324
    %v423 = vunpack.c.l.b16 %v325
    %v424 = vunpack.c.h.b16 %v325
    %v425 = vunpack.c.l.b16 %v326
    %v426 = vunpack.c.h.b16 %v326
    %v427 = vunpack.c.l.b16 %v327
    %v428 = vunpack.c.h.b16 %v327
    %v429 = vunpack.c.l.b16 %v328
    %v430 = vunpack.c.h.b16 %v328
    %v431 = vunpack.c.l.b16 %v329
    %v432 = vunpack.c.h.b16 %v329
    %v433 = vunpack.c.l.b16 %v330
    %v434 = vunpack.c.h.b16 %v330
    %v435 = vunpack.c.l.b16 %v331
    %v436 = vunpack.c.h.b16 %v331
    %v437 = vunpack.c.l.b16 %v332
    %v438 = vunpack.c.h.b16 %v332
    %v439 = vunpack.c.l.b16 %v333
    %v440 = vunpack.c.h.b16 %v333
    %v441 = vunpack.c.l.b16 %v334
    %v442 = vunpack.c.h.b16 %v334
    %v443 = vpack.c.b16 %v381, %v379
    %v444 = vpack.c.b16 %v382, %v380
    %v445 = vpack.c.b16 %v385, %v383
    %v446 = vpack.c.b16 %v386, %v384
    %v447 = vpack.c.b16 %v389, %v387
    %v448 = vpack.c.b16 %v390, %v388
    %v449 = vpack.c.b16 %v393, %v391
    %v450 = vpack.c.b16 %v394, %v392
    %v451 = vpack.c.b16 %v397, %v395
    %v452 = vpack.c.b16 %v398, %v396
    %v453 = vpack.c.b16 %v401, %v399
    %v454 = vpack.c.b16 %v402, %v400
    %v455 = vpack.c.b16 %v405, %v403
    %v456 = vpack.c.b16 %v406, %v404
    %v457 = vpack.c.b16 %v409, %v407
    %v458 = vpack.c.b16 %v410, %v408
    %v459 = vpack.c.b16 %v413, %v411
    %v460 = vpack.c.b16 %v414, %v412
    %v461 = vpack.c.b16 %v417, %v415
    %v462 = vpack.c.b16 %v418, %v416
    %v463 = vpack.c.b16 %v421, %v419
    %v464 = vpack.c.b16 %v422, %v420
    %v465 = vpack.c.b16 %v425, %v423
    %v466 = vpack.c.b16 %v426, %v424
    %v467 = vpack.c.b16 %v429, %v427
    %v468 = vpack.c.b16 %v430, %v428
    %v469 = vpack.c.b16 %v433, %v431
    %v470 = vpack.c.b16 %v434, %v432
    %v471 = vpack.c.b16 %v437, %v435
    %v472 = vpack.c.b16 %v438, %v436
    %v473 = vpack.c.b16 %v441, %v439
    %v474 = vpack.c.b16 %v442, %v440
    %507 = vmatprep.subr.bf16.mxu0 %v458
    %508 = vmatpush1.bf16.msra.mxu0 %v457
    %509 = vmatprep.subr.bf16.mxu0 %v456
    %510 = vmatpush1.bf16.msra.mxu0 %v455
    %511 = vmatprep.subr.bf16.mxu0 %v454
    %512 = vmatpush1.bf16.msra.mxu0 %v453
    %513 = vmatprep.subr.bf16.mxu0 %v452
    %514 = vmatpush1.bf16.msra.mxu0 %v451
    %515 = vmatprep.subr.bf16.mxu0 %v450
    %516 = vmatpush1.bf16.msra.mxu0 %v449
    %517 = vmatprep.subr.bf16.mxu0 %v448
    %518 = vmatpush1.bf16.msra.mxu0 %v447
    %519 = vmatprep.subr.bf16.mxu0 %v446
    %520 = vmatpush1.bf16.msra.mxu0 %v445
    %521 = vmatprep.subr.bf16.mxu0 %v444
    %522 = vmatpush1.bf16.msra.mxu0 %v443
    %523 = vmatprep.subr.bf16.mxu0 %v474
    %524 = vmatpush2.bf16.msra.mxu0 %v473
    %525 = vmatprep.subr.bf16.mxu0 %v472
    %526 = vmatpush2.bf16.msra.mxu0 %v471
    %527 = vmatprep.subr.bf16.mxu0 %v470
    %528 = vmatpush2.bf16.msra.mxu0 %v469
    %529 = vmatprep.subr.bf16.mxu0 %v468
    %530 = vmatpush2.bf16.msra.mxu0 %v467
    %531 = vmatprep.subr.bf16.mxu0 %v466
    %532 = vmatpush2.bf16.msra.mxu0 %v465
    %533 = vmatprep.subr.bf16.mxu0 %v464
    %534 = vmatpush2.bf16.msra.mxu0 %v463
    %535 = vmatprep.subr.bf16.mxu0 %v462
    %536 = vmatpush2.bf16.msra.mxu0 %v461
    %537 = vmatprep.subr.bf16.mxu0 %v460
    %538 = vmatpush2.bf16.msra.mxu0 %v459
    %539 = vmatprep.mubr.bf16.mxu0 %v302
    %540 = vmatmul.mubr.bf16.gmra.mxu0 %v301
    %v541 = vpop.f32.mrf.mxu0
    %v542 = vadd.f32 %v340, %v541
    %v543 = vpop.f32.mrf.mxu0
    %v544 = vadd.f32 %v344, %v543
    %v545 = vpop.f32.mrf.mxu0
    %v546 = vadd.f32 %v340, %v545
    %v547 = vpop.f32.mrf.mxu0
    %v548 = vadd.f32 %v344, %v547
    %549 = vdwg.mxu0
    %550 = vst [vmem:[%s5] sm:$0xff] %v542
    %551 = vst [vmem:[%s5 + $0x8] sm:$0xff] %v544
    %552 = vst [vmem:[%s5 + $0x10] sm:$0xff] %v546
    %553 = vst [vmem:[%s5 + $0x18] sm:$0xff] %v548
    // Predicated region
    $region30: #{_aft_forward_impl.1} parent=1 // pred_check
      _
    $region31: #{_aft_forward_impl.1} parent=1 // pred_check_branch
      %555 = sbr.rel (0) target = $region33
    $region32: #{_aft_forward_impl.1} parent=1 // pred_region
      _
    $region33: #{_aft_forward_impl.1} parent=1 // pred_fallthru
      _
    // Predicated region
    $region34: #{_aft_forward_impl.1} parent=1 // pred_check
      _
    $region35: #{_aft_forward_impl.1} parent=1 // pred_check_branch
      %557 = sbr.rel (0) target = $region37
    $region36: #{_aft_forward_impl.1} parent=1 // pred_region
      _
    $region37: #{_aft_forward_impl.1} parent=1 // pred_fallthru
      _
    %558 = vsyncpa [#allocation3], 1
    %559 = vsyncpa [#allocation5], 1

</llo_original>
